<compile_context>
chip_gen: v5e
topology: v5e:2x2
jax: 0.10.0
libtpu: 0.0.40
codegen_flags: <defaults>
</compile_context>

<pallas_src>
import jax
import jax.numpy as jnp
from jax.experimental import pallas as pl
from jax.experimental.pallas import tpu as pltpu


def neuralnet_kernel(x_ref, emb_ref, w_ref, b_ref, out_ref):
    # x_ref  : [B, L] int32 token ids (batch on sublanes, natural torch layout)
    # emb_ref: [V, D] f32 embedding table
    # w_ref  : [1, D] f32 Linear(D, 1) weight (torch layout [out, in])
    # b_ref  : [1]    f32 Linear bias (SMEM scalar)
    # out_ref: [B, 1] f32 sigmoid probabilities
    B, L = x_ref.shape
    V, D = emb_ref.shape

    # Per-vocab head weight as a lane row: v_head[0, v] = emb[v] . w.
    # One tiny MXU push (M=1, K=D, N=V) on an otherwise idle unit; result sits with
    # the vocab axis on lanes so it composes with the [B, V] accumulator below.
    v_head = jnp.einsum(
        "od,vd->ov", w_ref[...], emb_ref[...],
        preferred_element_type=jnp.float32,
    )                                                                  # [1, V]

    # Hoisted loop invariants (JAX does not CSE broadcast_in_dim).
    v_head_b = jnp.broadcast_to(v_head, (B, V))                        # [B, V]
    iota_v = jax.lax.broadcasted_iota(jnp.int32, (B, V), 1)            # vocab id on lanes
    zeros_bv = jnp.zeros((B, V), dtype=jnp.float32)

    # Weighted bag-of-words accumulation, fully in f32 (no int counts tile, no convert):
    #   acc[b, v] += v_head[v]  for every position l with x[b, l] == v
    # Short static unroll over L -> L lane-splat compares + selects + adds (pure VPU),
    # all within a single [8, <=128] vreg.
    idx = x_ref[...]                                                   # [B, L]
    acc = zeros_bv
    for l in range(L):
        hit = idx[:, l : l + 1] == iota_v                              # [B, V]
        acc = acc + jnp.where(hit, v_head_b, zeros_bv)

    # logits[b] = (1/L) * sum_v acc[b, v] + bias   (lane reduce on the idle XLU)
    logits = jnp.sum(acc, axis=-1, keepdims=True) * (1.0 / L) + b_ref[0]   # [B, 1]
    out_ref[...] = jax.nn.sigmoid(logits)


def neuralnet_forward(x, emb, w, b):
    """x: [B, L] int; emb: [V, D] f32; w: [1, D] f32; b: [1] f32 -> [B, 1] f32."""
    B, L = x.shape
    return pl.pallas_call(
        neuralnet_kernel,
        out_shape=jax.ShapeDtypeStruct((B, 1), jnp.float32),
        in_specs=[
            pl.BlockSpec(memory_space=pltpu.MemorySpace.VMEM),   # x   [B, L]
            pl.BlockSpec(memory_space=pltpu.MemorySpace.VMEM),   # emb [V, D]
            pl.BlockSpec(memory_space=pltpu.MemorySpace.VMEM),   # w   [1, D]
            pl.BlockSpec(memory_space=pltpu.MemorySpace.SMEM),   # b   [1] scalar
        ],
        out_specs=pl.BlockSpec(memory_space=pltpu.MemorySpace.VMEM),
    )(x.astype(jnp.int32), emb, w, b)


def reference_forward(x, emb, w, b):
    e = emb[x]                        # [B, L, D]
    pooled = jnp.mean(e, axis=1)      # [B, D]  (== AvgPool1d(L) on the transposed seq)
    logits = pooled @ w.T + b[0]      # [B, 1]
    return jax.nn.sigmoid(logits)


if __name__ == "__main__":
    # vocab of 'a'..'z' + 'unk' -> V = 27, sentence_length = 6, vector_dim = 32
    V, L, D = 27, 6, 32
    B = 8

    key = jax.random.PRNGKey(0)
    k_emb, k_w, k_b, k_x = jax.random.split(key, 4)

    emb = jax.random.normal(k_emb, (V, D), dtype=jnp.float32)
    w = jax.random.normal(k_w, (1, D), dtype=jnp.float32) * 0.1
    b = jax.random.normal(k_b, (1,), dtype=jnp.float32) * 0.1
    x = jax.random.randint(k_x, (B, L), 0, V, dtype=jnp.int32)

    y = neuralnet_forward(x, emb, w, b)
    y = jax.block_until_ready(y)

    y_ref = reference_forward(x, emb, w, b)
    assert y.shape == (B, 1)
    assert jnp.allclose(y, y_ref, atol=1e-5, rtol=1e-5)

    print("KERNEL_OK")
</pallas_src>

<mosaic_0001>
module attributes {stable_mosaic.version = 11 : i64} {
  func.func @neuralnet_kernel(%arg0: memref<8x6xi32, #tpu.memory_space<vmem>>, %arg1: memref<27x32xf32, #tpu.memory_space<vmem>>, %arg2: memref<1x32xf32, #tpu.memory_space<vmem>>, %arg3: memref<1xf32, #tpu.memory_space<smem>>, %arg4: memref<8x1xf32, #tpu.memory_space<vmem>>) attributes {dimension_semantics = [], scalar_prefetch = 0 : i64, scratch_operands = 0 : i64, tpu.core_type = #tpu.core_type<tc>} {
    %c0 = arith.constant 0 : index
    %c0_0 = arith.constant 0 : index
    %0 = vector.load %arg2[%c0, %c0_0] : memref<1x32xf32, #tpu.memory_space<vmem>>, vector<1x32xf32>
    %c0_1 = arith.constant 0 : index
    %c0_2 = arith.constant 0 : index
    %1 = vector.load %arg1[%c0_1, %c0_2] : memref<27x32xf32, #tpu.memory_space<vmem>>, vector<27x32xf32>
    "tpu.trace_start"() <{level = 10 : i32, message = "od,vd->ov"}> : () -> ()
    %cst = arith.constant dense<0.000000e+00> : vector<1x27xf32>
    %2 = tpu.matmul %0, %1, %cst {dimension_numbers = #tpu.dot_dimension_numbers<[1], [1], [0], [0], [0, 0, 1, 0], [], []>} : vector<1x32xf32>, vector<27x32xf32>, vector<1x27xf32> -> vector<1x27xf32>
    "tpu.trace_stop"() : () -> ()
    %3 = vector.shape_cast %2 : vector<1x27xf32> to vector<1x27xf32>
    %4 = vector.broadcast %3 : vector<1x27xf32> to vector<8x27xf32>
    %5 = tpu.iota {dimensions = array<i32: 1>} : vector<8x27xi32>
    %cst_3 = arith.constant 0.000000e+00 : f32
    %6 = vector.broadcast %cst_3 : f32 to vector<8x27xf32>
    %c0_4 = arith.constant 0 : index
    %c0_5 = arith.constant 0 : index
    %7 = vector.load %arg0[%c0_4, %c0_5] : memref<8x6xi32, #tpu.memory_space<vmem>>, vector<8x6xi32>
    %8 = vector.extract_strided_slice %7 {offsets = [0, 0], sizes = [8, 1], strides = [1, 1]} : vector<8x6xi32> to vector<8x1xi32>
    %9 = vector.broadcast %8 : vector<8x1xi32> to vector<8x27xi32>
    %10 = arith.cmpi eq, %9, %5 : vector<8x27xi32>
    %11 = arith.select %10, %4, %6 : vector<8x27xi1>, vector<8x27xf32>
    %12 = arith.addf %6, %11 : vector<8x27xf32>
    %13 = vector.extract_strided_slice %7 {offsets = [0, 1], sizes = [8, 1], strides = [1, 1]} : vector<8x6xi32> to vector<8x1xi32>
    %14 = vector.broadcast %13 : vector<8x1xi32> to vector<8x27xi32>
    %15 = arith.cmpi eq, %14, %5 : vector<8x27xi32>
    %16 = arith.select %15, %4, %6 : vector<8x27xi1>, vector<8x27xf32>
    %17 = arith.addf %12, %16 : vector<8x27xf32>
    %18 = vector.extract_strided_slice %7 {offsets = [0, 2], sizes = [8, 1], strides = [1, 1]} : vector<8x6xi32> to vector<8x1xi32>
    %19 = vector.broadcast %18 : vector<8x1xi32> to vector<8x27xi32>
    %20 = arith.cmpi eq, %19, %5 : vector<8x27xi32>
    %21 = arith.select %20, %4, %6 : vector<8x27xi1>, vector<8x27xf32>
    %22 = arith.addf %17, %21 : vector<8x27xf32>
    %23 = vector.extract_strided_slice %7 {offsets = [0, 3], sizes = [8, 1], strides = [1, 1]} : vector<8x6xi32> to vector<8x1xi32>
    %24 = vector.broadcast %23 : vector<8x1xi32> to vector<8x27xi32>
    %25 = arith.cmpi eq, %24, %5 : vector<8x27xi32>
    %26 = arith.select %25, %4, %6 : vector<8x27xi1>, vector<8x27xf32>
    %27 = arith.addf %22, %26 : vector<8x27xf32>
    %28 = vector.extract_strided_slice %7 {offsets = [0, 4], sizes = [8, 1], strides = [1, 1]} : vector<8x6xi32> to vector<8x1xi32>
    %29 = vector.broadcast %28 : vector<8x1xi32> to vector<8x27xi32>
    %30 = arith.cmpi eq, %29, %5 : vector<8x27xi32>
    %31 = arith.select %30, %4, %6 : vector<8x27xi1>, vector<8x27xf32>
    %32 = arith.addf %27, %31 : vector<8x27xf32>
    %33 = vector.extract_strided_slice %7 {offsets = [0, 5], sizes = [8, 1], strides = [1, 1]} : vector<8x6xi32> to vector<8x1xi32>
    %34 = vector.broadcast %33 : vector<8x1xi32> to vector<8x27xi32>
    %35 = arith.cmpi eq, %34, %5 : vector<8x27xi32>
    %36 = arith.select %35, %4, %6 : vector<8x27xi1>, vector<8x27xf32>
    %37 = arith.addf %32, %36 : vector<8x27xf32>
    %cst_6 = arith.constant dense<0.000000e+00> : vector<8xf32>
    %38 = vector.multi_reduction <add>, %37, %cst_6 [1] : vector<8x27xf32> to vector<8xf32>
    %39 = vector.shape_cast %38 : vector<8xf32> to vector<8x1xf32>
    %cst_7 = arith.constant 0.166666672 : f32
    %40 = vector.broadcast %cst_7 : f32 to vector<8x1xf32>
    %41 = arith.mulf %39, %40 : vector<8x1xf32>
    %c0_8 = arith.constant 0 : index
    %42 = memref.load %arg3[%c0_8] : memref<1xf32, #tpu.memory_space<smem>>
    %43 = vector.broadcast %42 : f32 to vector<8x1xf32>
    %44 = arith.addf %41, %43 : vector<8x1xf32>
    %45 = arith.negf %44 : vector<8x1xf32>
    %46 = math.exp %45 : vector<8x1xf32>
    %cst_9 = arith.constant 1.000000e+00 : f32
    %47 = vector.broadcast %cst_9 : f32 to vector<8x1xf32>
    %48 = arith.addf %47, %46 : vector<8x1xf32>
    %49 = arith.divf %47, %48 : vector<8x1xf32>
    %c0_10 = arith.constant 0 : index
    %c0_11 = arith.constant 0 : index
    %50 = vector.load %arg4[%c0_10, %c0_11] : memref<8x1xf32, #tpu.memory_space<vmem>>, vector<8x1xf32>
    tpu.vector_store %arg4[%c0_10, %c0_11], %49 {strides = array<i32>} : memref<8x1xf32, #tpu.memory_space<vmem>>, vector<8x1xf32>,
    return
  }
}

</mosaic_0001>

<llo_original>
// kernel: tpu_custom_call.1
$region0: #{tpu_custom_call.1}
  #allocation0 [shape = 'u32[]', space=smem, size = 0x4, offset = 0x4, fixed_abs, tag = 'smem constant byte address 0x4 - core index']
  #allocation1 [shape = 'u32[72,128]{1,0:T(1,128)}', space=vmem, size = 0x9000, scoped, tag = 'internal scratch']
  #allocation2 [shape = 'f32[1]{0:T(128)S(6)}', space=smem, size = 0x200, scoped, tag = 'scoped memory for tpu_custom_call.1']
  %s0 = inlined_call_operand.hbm [shape: s32[8,6], index: 0, kind: input, shape index: {}]
  %s1 = inlined_call_operand.hbm [shape: f32[27,32], index: 1, kind: input, shape index: {}]
  %s2 = inlined_call_operand.vmem [shape: f32[1,32], index: 2, kind: input, shape index: {}]
  %s3 = inlined_call_operand.<no memory space> [shape: f32[1], index: 3, kind: input, shape index: {}]
  %s4 = inlined_call_operand.vmem [shape: f32[8,1], index: 4, kind: output, shape index: {}]
  %s5 = sld [smem:[#allocation0]]
  $region34: #{tpu_custom_call.1} parent=0
    _
  %s7 = ssub.s32 1, %s5
  %s8 = scalar_select 0, %s7, %s5
  %9 = sst [smem:[#allocation2]] %s3
  $region1: #{tpu_custom_call.1} parent=0
    #allocation3 [shape = 'u8[4096]{0}', space=vmem, size = 0x1000, scoped, tag = 'input window, operand 0, single buffered']
    #allocation4 [shape = 's32[1]{0}', space=sflag, size = 0x4, scoped, tag = 'scoped memory for tpu_custom_call.1']
    #allocation5 [shape = 'u8[16384]{0}', space=vmem, size = 0x4000, scoped, tag = 'input window, operand 1, single buffered']
    #allocation6 [shape = 's32[1]{0}', space=sflag, size = 0x4, scoped, tag = 'scoped memory for tpu_custom_call.1']
    %10 = vsyncpa [#allocation4], 0
    %11 = vsyncpa [#allocation6], 0
    // Predicated region
    $region2: #{tpu_custom_call.1} parent=1 // pred_check
      _
    $region3: #{tpu_custom_call.1} parent=1 // pred_check_branch
      %13 = sbr.rel (0) target = $region5
    $region4: #{tpu_custom_call.1} parent=1 // pred_region
      %15 = vsyncadd [#allocation4], 0
      %s17 = sshll.u32 %s0, 4
      %s18 = int_to_ptr.hbm [resolvable:$true] %s17
      %s19 = sshll.u32 [#allocation3], 4
      %s20 = int_to_ptr.vmem [resolvable:$true] %s19
      %22 = dma.hbm_to_vmem [thread:$0]  %s18, 128, %s20, [#allocation4]
    $region5: #{tpu_custom_call.1} parent=1 // pred_fallthru
      _
    // Predicated region
    $region6: #{tpu_custom_call.1} parent=1 // pred_check
      _
    $region7: #{tpu_custom_call.1} parent=1 // pred_check_branch
      %24 = sbr.rel (0) target = $region9
    $region8: #{tpu_custom_call.1} parent=1 // pred_region
      %26 = vsyncadd [#allocation6], 0
      %s27 = sshll.u32 %s1, 4
      %s28 = int_to_ptr.hbm [resolvable:$true] %s27
      %s29 = sshll.u32 [#allocation5], 4
      %s30 = int_to_ptr.vmem [resolvable:$true] %s29
      %35 = dma.hbm_to_vmem [thread:$0]  %s28, 512, %s30, [#allocation6], 128, 128, 8
    $region9: #{tpu_custom_call.1} parent=1 // pred_fallthru
      _
    // Predicated region
    $region10: #{tpu_custom_call.1} parent=1 // pred_check
      _
    $region11: #{tpu_custom_call.1} parent=1 // pred_check_branch
      %37 = sbr.rel (0) target = $region13
    $region12: #{tpu_custom_call.1} parent=1 // pred_region
      _
    $region13: #{tpu_custom_call.1} parent=1 // pred_fallthru
      _
    // Predicated region
    $region14: #{tpu_custom_call.1} parent=1 // pred_check
      _
    $region15: #{tpu_custom_call.1} parent=1 // pred_check_branch
      %39 = sbr.rel (0) target = $region17
    $region16: #{tpu_custom_call.1} parent=1 // pred_region
      _
    $region17: #{tpu_custom_call.1} parent=1 // pred_fallthru
      _
    // Predicated region
    $region18: #{tpu_custom_call.1} parent=1 // pred_check
      _
    $region19: #{tpu_custom_call.1} parent=1 // pred_check_branch
      %41 = sbr.rel (0) target = $region21
    $region20: #{tpu_custom_call.1} parent=1 // pred_region
      %43 = dma.done [#allocation4], 128
    $region21: #{tpu_custom_call.1} parent=1 // pred_fallthru
      _
    // Predicated region
    $region22: #{tpu_custom_call.1} parent=1 // pred_check
      _
    $region23: #{tpu_custom_call.1} parent=1 // pred_check_branch
      %45 = sbr.rel (0) target = $region25
    $region24: #{tpu_custom_call.1} parent=1 // pred_region
      %47 = dma.done [#allocation6], 512
    $region25: #{tpu_custom_call.1} parent=1 // pred_fallthru
      _
    %v48 = vld [vmem:[%s2] sm:$0x1]
    %v49 = vld [vmem:[#allocation5] sm:$0xff]
    %v50 = vld [vmem:[#allocation5 + $0x8] sm:$0xff]
    %v51 = vld [vmem:[#allocation5 + $0x10] sm:$0xff]
    %v52 = vld [vmem:[#allocation5 + $0x18] sm:$0x7]
    %vm53 = vcmask 261120
    %v55 = vsel %vm53, %v48, 0
    %v58 = vsel %vm53, %v49, 0
    %v61 = vsel %vm53, %v50, 0
    %v64 = vsel %vm53, %v51, 0
    %v67 = vsel %vm53, %v52, 0
    %69 = vmatpush.xpose.msra.mxu0 0.0
    %70 = vmatpush.xpose.msra.mxu0 0.0
    %71 = vmatpush.xpose.msra.mxu0 0.0
    %72 = vmatpush.xpose.msra.mxu0 0.0
    %73 = vmatpush.xpose.msra.mxu0 0.0
    %74 = vmatpush.xpose.msra.mxu0 0.0
    %75 = vmatpush.xpose.msra.mxu0 0.0
    %76 = vmatpush.xpose.msra.mxu0 0.0
    %77 = vmatpush.xpose.msra.mxu0 0.0
    %78 = vmatpush.xpose.msra.mxu0 0.0
    %79 = vmatpush.xpose.msra.mxu0 0.0
    %80 = vmatpush.xpose.msra.mxu0 0.0
    %81 = vmatpush.xpose.msra.mxu0 %v67
    %82 = vmatpush.xpose.msra.mxu0 %v64
    %83 = vmatpush.xpose.msra.mxu0 %v61
    %84 = vmatpush.xpose.msra.mxu0 %v58
    %85 = vmatmul.f32.gmra.mxu0 %v55
    %v86 = vpop.f32.mrf.mxu0
    %v87 = vadd.f32 0.0, %v86
    %88 = vdwg.mxu0
    %v89 = vperm.slane %v87, 0
    %v90 = vlaneseq
    %v91 = vand.u32 %v90, 127
    %v92 = vld [vmem:[#allocation3] sm:$0xff]
    %93 = vset.pattern.permute.xlu0 0
    %94 = vperm.xlu0 %93, %v92
    %v95 = vpop.permute.xlu0 %94
    %vm96 = vcmp.eq.s32.totalorder %v95, %v91
    %v97 = vsel %vm96, %v89, 0.0
    %v98 = vadd.f32 %v97, 0.0
    %99 = vset.pattern.permute.xlu0 1
    %100 = vperm.xlu0 %99, %v92
    %v101 = vpop.permute.xlu0 %100
    %vm102 = vcmp.eq.s32.totalorder %v101, %v91
    %v103 = vsel %vm102, %v89, 0.0
    %v104 = vadd.f32 %v98, %v103
    %105 = vset.pattern.permute.xlu0 2
    %106 = vperm.xlu0 %105, %v92
    %v107 = vpop.permute.xlu0 %106
    %vm108 = vcmp.eq.s32.totalorder %v107, %v91
    %v109 = vsel %vm108, %v89, 0.0
    %v110 = vadd.f32 %v104, %v109
    %111 = vset.pattern.permute.xlu0 3
    %112 = vperm.xlu0 %111, %v92
    %v113 = vpop.permute.xlu0 %112
    %vm114 = vcmp.eq.s32.totalorder %v113, %v91
    %v115 = vsel %vm114, %v89, 0.0
    %v116 = vadd.f32 %v110, %v115
    %117 = vset.pattern.permute.xlu0 4
    %118 = vperm.xlu0 %117, %v92
    %v119 = vpop.permute.xlu0 %118
    %vm120 = vcmp.eq.s32.totalorder %v119, %v91
    %v121 = vsel %vm120, %v89, 0.0
    %v122 = vadd.f32 %v116, %v121
    %123 = vset.pattern.permute.xlu0 5
    %124 = vperm.xlu0 %123, %v92
    %v125 = vpop.permute.xlu0 %124
    %vm126 = vcmp.eq.s32.totalorder %v125, %v91
    %v127 = vsel %vm126, %v89, 0.0
    %v128 = vadd.f32 %v122, %v127
    %vm129 = vcmask 220160
    %v130 = vsel %vm129, %v128, 0.0
    %131 = vadd.xlane.f32.xlu0 %v130
    %v132 = vpop.xlane.xlu0 %131
    %v133 = vmul.f32 %v132, 0.16666667
    %s134 = sld [smem:[#allocation2]]
    %v135 = vstv %s134
    %v136 = vadd.f32 %v133, %v135
    %v137 = vxor.u32 %v136, 2147483648
    %v138 = vmul.f32 %v137, 1.442695
    %v139 = vpow.pop %v138
    %v140 = vadd.f32 %v139, 1.0
    %v141 = vrcp.pop %v140
    %v142 = vmul.f32 %v140, %v141
    %v143 = vsub.f32 1.0, %v142
    %v144 = vmul.f32 %v141, %v143
    %v145 = vadd.f32 %v141, %v144
    %vm146 = vweird.f32 %v140
    %vm147 = vweird.f32 %v141
    %vm148 = vmor %vm146, %vm147
    %v149 = vsel %vm148, %v141, %v145
    %v150 = vand.u32 2147483647, %v140
    %vm151 = vcmp.eq.f32.partialorder %v150, 8.507059e+37
    %v152 = vand.u32 %v140, 2147483648
    %v153 = vor.u32 1.1754944e-38, %v152
    %v154 = vsel %vm151, %v153, %v149
    %v155 = vmul.f32 1.0, %v154
    %vm156 = vcmask 7168
    %157 = vst.msk [vmem:[%s4] sm:$0xff] %vm156, %v155
    // Predicated region
    $region26: #{tpu_custom_call.1} parent=1 // pred_check
      _
    $region27: #{tpu_custom_call.1} parent=1 // pred_check_branch
      %159 = sbr.rel (0) target = $region29
    $region28: #{tpu_custom_call.1} parent=1 // pred_region
      _
    $region29: #{tpu_custom_call.1} parent=1 // pred_fallthru
      _
    // Predicated region
    $region30: #{tpu_custom_call.1} parent=1 // pred_check
      _
    $region31: #{tpu_custom_call.1} parent=1 // pred_check_branch
      %161 = sbr.rel (0) target = $region33
    $region32: #{tpu_custom_call.1} parent=1 // pred_region
      _
    $region33: #{tpu_custom_call.1} parent=1 // pred_fallthru
      _
    %162 = vsyncpa [#allocation4], 1
    %163 = vsyncpa [#allocation6], 1

</llo_original>
